<compile_context>
chip_gen: v7x
topology: tpu7x:2x2x1
jax: 0.10.0
libtpu: 0.0.40
codegen_flags: <defaults>
</compile_context>

<pallas_src>
import jax
import jax.numpy as jnp
import numpy as np
from jax.experimental import pallas as pl
from jax.experimental.pallas import tpu as pltpu


def fol_enc_kernel(idx_ref, gx_tab_ref, whh_ref, b_ref, out_ref):
    S, H = out_ref.shape
    V = gx_tab_ref.shape[0]

    # ---------------- prologue: hoisted off the serial recurrence -----------
    # Fused embedding lookup + input projection as a single one-hot matmul:
    # (S, V) @ (V, 4H) -> (S, 4H), plus the fused (and pre-scaled) bias.
    iota_v = jax.lax.broadcasted_iota(jnp.int32, (S, V), 1)
    onehot = (iota_v == idx_ref[...]).astype(jnp.float32)               # (S, V)
    gates_x = jnp.dot(onehot, gx_tab_ref[...],
                      preferred_element_type=jnp.float32) + b_ref[...]  # (S, 4H)

    # Hoist the recurrent weight load and the per-step row slices.
    whh = whh_ref[...]                                                  # (H, 4H)
    gx_rows = [gates_x[t:t + 1, :] for t in range(S)]

    # ---------------- recurrence: fully unrolled, h/c live in vregs ---------
    h = jnp.zeros((1, H), jnp.float32)
    c = jnp.zeros((1, H), jnp.float32)
    half = jnp.float32(0.5)
    for t in range(S):  # S is static and small -> full unroll
        gates = gx_rows[t] + jnp.dot(h, whh,
                                     preferred_element_type=jnp.float32)  # (1, 4H)

        # 2 EUP pushes per step: one full-width tanh on the gate vector
        # (i/f/o lanes were pre-scaled by 0.5 in the wrapper, so
        # sigmoid(x) == 0.5*tanh(x/2) + 0.5 needs only a VPU affine fixup),
        # plus tanh(c) below.
        th = jnp.tanh(gates)                # lanes: [ i' | f' | g | o' ]
        i = th[:, 0 * H:1 * H] * half + half
        f = th[:, 1 * H:2 * H] * half + half
        g = th[:, 2 * H:3 * H]
        o = th[:, 3 * H:4 * H] * half + half

        c = f * c + i * g
        h = o * jnp.tanh(c)

        # Per-step store rides the idle store slot; no epilogue concat.
        out_ref[t:t + 1, :] = h.astype(out_ref.dtype)


def fol_enc_forward(fol_as_indices, emb_table, w_ih, w_hh, b_ih, b_hh):
    """Pallas forward. fol_as_indices: (S,) int; returns (S, 1, H) float32."""
    idx = fol_as_indices.reshape(-1).astype(jnp.int32).reshape(-1, 1)  # (S, 1)
    S = idx.shape[0]
    H = w_hh.shape[1]

    # ---- weight-only precompute (static per model, not per-token work) ----
    # Column scale [0.5 | 0.5 | 1 | 0.5] over the i|f|g|o gate lanes folds the
    # sigmoid->tanh rescale into the weights/bias.
    gate_scale = jnp.concatenate([
        jnp.full((H,), 0.5, jnp.float32),   # i
        jnp.full((H,), 0.5, jnp.float32),   # f
        jnp.ones((H,), jnp.float32),        # g
        jnp.full((H,), 0.5, jnp.float32),   # o
    ]).reshape(1, 4 * H)

    # Fused embedding + input projection table: (V, E) @ (E, 4H) -> (V, 4H).
    gx_table = (emb_table.astype(jnp.float32)
                @ w_ih.T.astype(jnp.float32)) * gate_scale              # (V, 4H)
    whh_t = w_hh.T.astype(jnp.float32) * gate_scale                     # (H, 4H)
    b = (b_ih + b_hh).astype(jnp.float32).reshape(1, 4 * H) * gate_scale

    vmem = pl.BlockSpec(memory_space=pltpu.MemorySpace.VMEM)
    out = pl.pallas_call(
        fol_enc_kernel,
        out_shape=jax.ShapeDtypeStruct((S, H), jnp.float32),
        in_specs=[vmem, vmem, vmem, vmem],
        out_specs=vmem,
    )(idx, gx_table, whh_t, b)

    # PyTorch nn.LSTM (no batch_first) returns (seq_len, batch=1, hidden_dim).
    return out.reshape(S, 1, H)


def fol_enc_reference(fol_as_indices, emb_table, w_ih, w_hh, b_ih, b_hh):
    """Pure-JAX f32 reference matching torch.nn.Embedding + torch.nn.LSTM."""
    idx = fol_as_indices.reshape(-1).astype(jnp.int32)
    H = w_hh.shape[1]
    embeds = emb_table[idx]                          # (S, E)
    h = jnp.zeros((H,), jnp.float32)
    c = jnp.zeros((H,), jnp.float32)
    outs = []
    for t in range(idx.shape[0]):
        gates = w_ih @ embeds[t] + b_ih + w_hh @ h + b_hh
        i = jax.nn.sigmoid(gates[0 * H:1 * H])
        f = jax.nn.sigmoid(gates[1 * H:2 * H])
        g = jnp.tanh(gates[2 * H:3 * H])
        o = jax.nn.sigmoid(gates[3 * H:4 * H])
        c = f * c + i * g
        h = o * jnp.tanh(c)
        outs.append(h)
    return jnp.stack(outs).reshape(len(outs), 1, H)


if __name__ == "__main__":
    # Small config consistent with the module: vocab=16, embedding_dim=32,
    # hidden_dim=32, sequence of 9 FOL token indices (per the docstring).
    VOCAB, EMB, HID, SEQ = 16, 32, 32, 9

    key = jax.random.PRNGKey(0)
    k_emb, k_wih, k_whh, k_bih, k_bhh, k_idx = jax.random.split(key, 6)

    bound = 1.0 / np.sqrt(HID)  # PyTorch LSTM init range
    emb_table = jax.random.normal(k_emb, (VOCAB, EMB), jnp.float32) * 0.1
    w_ih = jax.random.uniform(k_wih, (4 * HID, EMB), jnp.float32, -bound, bound)
    w_hh = jax.random.uniform(k_whh, (4 * HID, HID), jnp.float32, -bound, bound)
    b_ih = jax.random.uniform(k_bih, (4 * HID,), jnp.float32, -bound, bound)
    b_hh = jax.random.uniform(k_bhh, (4 * HID,), jnp.float32, -bound, bound)

    fol_as_indices = jax.random.randint(k_idx, (SEQ,), 0, VOCAB, jnp.int32)

    lstm_out = fol_enc_forward(fol_as_indices, emb_table, w_ih, w_hh, b_ih, b_hh)
    lstm_out = jax.block_until_ready(lstm_out)

    ref = fol_enc_reference(fol_as_indices, emb_table, w_ih, w_hh, b_ih, b_hh)
    assert lstm_out.shape == (SEQ, 1, HID)
    # All-f32 operands now (no bf16 MXU casts), so tolerance is back to 2e-3;
    # residual drift comes only from the fused-table matmul association and
    # the sigmoid-via-tanh identity.
    np.testing.assert_allclose(np.asarray(lstm_out), np.asarray(ref),
                               rtol=2e-3, atol=2e-3)

    print("KERNEL_OK")
</pallas_src>

<mosaic_0001>
module attributes {stable_mosaic.version = 11 : i64} {
  func.func @fol_enc_kernel(%arg0: memref<9x1xi32, #tpu.memory_space<vmem>>, %arg1: memref<16x128xf32, #tpu.memory_space<vmem>>, %arg2: memref<32x128xf32, #tpu.memory_space<vmem>>, %arg3: memref<1x128xf32, #tpu.memory_space<vmem>>, %arg4: memref<9x32xf32, #tpu.memory_space<vmem>>) attributes {dimension_semantics = [], scalar_prefetch = 0 : i64, scratch_operands = 0 : i64, tpu.core_type = #tpu.core_type<tc>} {
    %0 = tpu.iota {dimensions = array<i32: 1>} : vector<9x16xi32>
    %c0 = arith.constant 0 : index
    %c0_0 = arith.constant 0 : index
    %1 = vector.load %arg0[%c0, %c0_0] : memref<9x1xi32, #tpu.memory_space<vmem>>, vector<9x1xi32>
    %2 = vector.broadcast %1 : vector<9x1xi32> to vector<9x16xi32>
    %3 = arith.cmpi eq, %0, %2 : vector<9x16xi32>
    %4 = arith.extui %3 : vector<9x16xi1> to vector<9x16xi32>
    %5 = arith.sitofp %4 : vector<9x16xi32> to vector<9x16xf32>
    %c0_1 = arith.constant 0 : index
    %c0_2 = arith.constant 0 : index
    %6 = vector.load %arg1[%c0_1, %c0_2] : memref<16x128xf32, #tpu.memory_space<vmem>>, vector<16x128xf32>
    %cst = arith.constant dense<0.000000e+00> : vector<9x128xf32>
    %7 = tpu.matmul %5, %6, %cst {dimension_numbers = #tpu.dot_dimension_numbers<[1], [0], [0], [1], [0, 0, 1, 1], [], []>} : vector<9x16xf32>, vector<16x128xf32>, vector<9x128xf32> -> vector<9x128xf32>
    %c0_3 = arith.constant 0 : index
    %c0_4 = arith.constant 0 : index
    %8 = vector.load %arg3[%c0_3, %c0_4] : memref<1x128xf32, #tpu.memory_space<vmem>>, vector<1x128xf32>
    %9 = vector.broadcast %8 : vector<1x128xf32> to vector<9x128xf32>
    %10 = arith.addf %7, %9 : vector<9x128xf32>
    %c0_5 = arith.constant 0 : index
    %c0_6 = arith.constant 0 : index
    %11 = vector.load %arg2[%c0_5, %c0_6] : memref<32x128xf32, #tpu.memory_space<vmem>>, vector<32x128xf32>
    %12 = vector.extract_strided_slice %10 {offsets = [0, 0], sizes = [1, 128], strides = [1, 1]} : vector<9x128xf32> to vector<1x128xf32>
    %13 = vector.extract_strided_slice %10 {offsets = [1, 0], sizes = [1, 128], strides = [1, 1]} : vector<9x128xf32> to vector<1x128xf32>
    %14 = vector.extract_strided_slice %10 {offsets = [2, 0], sizes = [1, 128], strides = [1, 1]} : vector<9x128xf32> to vector<1x128xf32>
    %15 = vector.extract_strided_slice %10 {offsets = [3, 0], sizes = [1, 128], strides = [1, 1]} : vector<9x128xf32> to vector<1x128xf32>
    %16 = vector.extract_strided_slice %10 {offsets = [4, 0], sizes = [1, 128], strides = [1, 1]} : vector<9x128xf32> to vector<1x128xf32>
    %17 = vector.extract_strided_slice %10 {offsets = [5, 0], sizes = [1, 128], strides = [1, 1]} : vector<9x128xf32> to vector<1x128xf32>
    %18 = vector.extract_strided_slice %10 {offsets = [6, 0], sizes = [1, 128], strides = [1, 1]} : vector<9x128xf32> to vector<1x128xf32>
    %19 = vector.extract_strided_slice %10 {offsets = [7, 0], sizes = [1, 128], strides = [1, 1]} : vector<9x128xf32> to vector<1x128xf32>
    %20 = vector.extract_strided_slice %10 {offsets = [8, 0], sizes = [1, 128], strides = [1, 1]} : vector<9x128xf32> to vector<1x128xf32>
    %cst_7 = arith.constant 0.000000e+00 : f32
    %21 = vector.broadcast %cst_7 : f32 to vector<1x32xf32>
    %cst_8 = arith.constant 0.000000e+00 : f32
    %22 = vector.broadcast %cst_8 : f32 to vector<1x32xf32>
    %cst_9 = arith.constant dense<0.000000e+00> : vector<1x128xf32>
    %23 = tpu.matmul %21, %11, %cst_9 {dimension_numbers = #tpu.dot_dimension_numbers<[1], [0], [0], [1], [0, 0, 1, 1], [], []>} : vector<1x32xf32>, vector<32x128xf32>, vector<1x128xf32> -> vector<1x128xf32>
    %24 = arith.addf %12, %23 : vector<1x128xf32>
    %25 = math.tanh %24 : vector<1x128xf32>
    %26 = vector.extract_strided_slice %25 {offsets = [0, 0], sizes = [1, 32], strides = [1, 1]} : vector<1x128xf32> to vector<1x32xf32>
    %cst_10 = arith.constant 5.000000e-01 : f32
    %27 = vector.broadcast %cst_10 : f32 to vector<1x32xf32>
    %28 = arith.mulf %26, %27 : vector<1x32xf32>
    %cst_11 = arith.constant 5.000000e-01 : f32
    %29 = vector.broadcast %cst_11 : f32 to vector<1x32xf32>
    %30 = arith.addf %28, %29 : vector<1x32xf32>
    %31 = vector.extract_strided_slice %25 {offsets = [0, 32], sizes = [1, 32], strides = [1, 1]} : vector<1x128xf32> to vector<1x32xf32>
    %cst_12 = arith.constant 5.000000e-01 : f32
    %32 = vector.broadcast %cst_12 : f32 to vector<1x32xf32>
    %33 = arith.mulf %31, %32 : vector<1x32xf32>
    %cst_13 = arith.constant 5.000000e-01 : f32
    %34 = vector.broadcast %cst_13 : f32 to vector<1x32xf32>
    %35 = arith.addf %33, %34 : vector<1x32xf32>
    %36 = vector.extract_strided_slice %25 {offsets = [0, 64], sizes = [1, 32], strides = [1, 1]} : vector<1x128xf32> to vector<1x32xf32>
    %37 = vector.extract_strided_slice %25 {offsets = [0, 96], sizes = [1, 32], strides = [1, 1]} : vector<1x128xf32> to vector<1x32xf32>
    %cst_14 = arith.constant 5.000000e-01 : f32
    %38 = vector.broadcast %cst_14 : f32 to vector<1x32xf32>
    %39 = arith.mulf %37, %38 : vector<1x32xf32>
    %cst_15 = arith.constant 5.000000e-01 : f32
    %40 = vector.broadcast %cst_15 : f32 to vector<1x32xf32>
    %41 = arith.addf %39, %40 : vector<1x32xf32>
    %42 = arith.mulf %35, %22 : vector<1x32xf32>
    %43 = arith.mulf %30, %36 : vector<1x32xf32>
    %44 = arith.addf %42, %43 : vector<1x32xf32>
    %45 = math.tanh %44 : vector<1x32xf32>
    %46 = arith.mulf %41, %45 : vector<1x32xf32>
    %c0_16 = arith.constant 0 : index
    %c0_17 = arith.constant 0 : index
    %47 = vector.load %arg4[%c0_16, %c0_17] : memref<9x32xf32, #tpu.memory_space<vmem>>, vector<1x32xf32>
    tpu.vector_store %arg4[%c0_16, %c0_17], %46 {strides = array<i32>} : memref<9x32xf32, #tpu.memory_space<vmem>>, vector<1x32xf32>,
    %cst_18 = arith.constant dense<0.000000e+00> : vector<1x128xf32>
    %48 = tpu.matmul %46, %11, %cst_18 {dimension_numbers = #tpu.dot_dimension_numbers<[1], [0], [0], [1], [0, 0, 1, 1], [], []>} : vector<1x32xf32>, vector<32x128xf32>, vector<1x128xf32> -> vector<1x128xf32>
    %49 = arith.addf %13, %48 : vector<1x128xf32>
    %50 = math.tanh %49 : vector<1x128xf32>
    %51 = vector.extract_strided_slice %50 {offsets = [0, 0], sizes = [1, 32], strides = [1, 1]} : vector<1x128xf32> to vector<1x32xf32>
    %cst_19 = arith.constant 5.000000e-01 : f32
    %52 = vector.broadcast %cst_19 : f32 to vector<1x32xf32>
    %53 = arith.mulf %51, %52 : vector<1x32xf32>
    %cst_20 = arith.constant 5.000000e-01 : f32
    %54 = vector.broadcast %cst_20 : f32 to vector<1x32xf32>
    %55 = arith.addf %53, %54 : vector<1x32xf32>
    %56 = vector.extract_strided_slice %50 {offsets = [0, 32], sizes = [1, 32], strides = [1, 1]} : vector<1x128xf32> to vector<1x32xf32>
    %cst_21 = arith.constant 5.000000e-01 : f32
    %57 = vector.broadcast %cst_21 : f32 to vector<1x32xf32>
    %58 = arith.mulf %56, %57 : vector<1x32xf32>
    %cst_22 = arith.constant 5.000000e-01 : f32
    %59 = vector.broadcast %cst_22 : f32 to vector<1x32xf32>
    %60 = arith.addf %58, %59 : vector<1x32xf32>
    %61 = vector.extract_strided_slice %50 {offsets = [0, 64], sizes = [1, 32], strides = [1, 1]} : vector<1x128xf32> to vector<1x32xf32>
    %62 = vector.extract_strided_slice %50 {offsets = [0, 96], sizes = [1, 32], strides = [1, 1]} : vector<1x128xf32> to vector<1x32xf32>
    %cst_23 = arith.constant 5.000000e-01 : f32
    %63 = vector.broadcast %cst_23 : f32 to vector<1x32xf32>
    %64 = arith.mulf %62, %63 : vector<1x32xf32>
    %cst_24 = arith.constant 5.000000e-01 : f32
    %65 = vector.broadcast %cst_24 : f32 to vector<1x32xf32>
    %66 = arith.addf %64, %65 : vector<1x32xf32>
    %67 = arith.mulf %60, %44 : vector<1x32xf32>
    %68 = arith.mulf %55, %61 : vector<1x32xf32>
    %69 = arith.addf %67, %68 : vector<1x32xf32>
    %70 = math.tanh %69 : vector<1x32xf32>
    %71 = arith.mulf %66, %70 : vector<1x32xf32>
    %c1 = arith.constant 1 : index
    %c0_25 = arith.constant 0 : index
    %72 = vector.load %arg4[%c1, %c0_25] : memref<9x32xf32, #tpu.memory_space<vmem>>, vector<1x32xf32>
    tpu.vector_store %arg4[%c1, %c0_25], %71 {strides = array<i32>} : memref<9x32xf32, #tpu.memory_space<vmem>>, vector<1x32xf32>,
    %cst_26 = arith.constant dense<0.000000e+00> : vector<1x128xf32>
    %73 = tpu.matmul %71, %11, %cst_26 {dimension_numbers = #tpu.dot_dimension_numbers<[1], [0], [0], [1], [0, 0, 1, 1], [], []>} : vector<1x32xf32>, vector<32x128xf32>, vector<1x128xf32> -> vector<1x128xf32>
    %74 = arith.addf %14, %73 : vector<1x128xf32>
    %75 = math.tanh %74 : vector<1x128xf32>
    %76 = vector.extract_strided_slice %75 {offsets = [0, 0], sizes = [1, 32], strides = [1, 1]} : vector<1x128xf32> to vector<1x32xf32>
    %cst_27 = arith.constant 5.000000e-01 : f32
    %77 = vector.broadcast %cst_27 : f32 to vector<1x32xf32>
    %78 = arith.mulf %76, %77 : vector<1x32xf32>
    %cst_28 = arith.constant 5.000000e-01 : f32
    %79 = vector.broadcast %cst_28 : f32 to vector<1x32xf32>
    %80 = arith.addf %78, %79 : vector<1x32xf32>
    %81 = vector.extract_strided_slice %75 {offsets = [0, 32], sizes = [1, 32], strides = [1, 1]} : vector<1x128xf32> to vector<1x32xf32>
    %cst_29 = arith.constant 5.000000e-01 : f32
    %82 = vector.broadcast %cst_29 : f32 to vector<1x32xf32>
    %83 = arith.mulf %81, %82 : vector<1x32xf32>
    %cst_30 = arith.constant 5.000000e-01 : f32
    %84 = vector.broadcast %cst_30 : f32 to vector<1x32xf32>
    %85 = arith.addf %83, %84 : vector<1x32xf32>
    %86 = vector.extract_strided_slice %75 {offsets = [0, 64], sizes = [1, 32], strides = [1, 1]} : vector<1x128xf32> to vector<1x32xf32>
    %87 = vector.extract_strided_slice %75 {offsets = [0, 96], sizes = [1, 32], strides = [1, 1]} : vector<1x128xf32> to vector<1x32xf32>
    %cst_31 = arith.constant 5.000000e-01 : f32
    %88 = vector.broadcast %cst_31 : f32 to vector<1x32xf32>
    %89 = arith.mulf %87, %88 : vector<1x32xf32>
    %cst_32 = arith.constant 5.000000e-01 : f32
    %90 = vector.broadcast %cst_32 : f32 to vector<1x32xf32>
    %91 = arith.addf %89, %90 : vector<1x32xf32>
    %92 = arith.mulf %85, %69 : vector<1x32xf32>
    %93 = arith.mulf %80, %86 : vector<1x32xf32>
    %94 = arith.addf %92, %93 : vector<1x32xf32>
    %95 = math.tanh %94 : vector<1x32xf32>
    %96 = arith.mulf %91, %95 : vector<1x32xf32>
    %c2 = arith.constant 2 : index
    %c0_33 = arith.constant 0 : index
    %97 = vector.load %arg4[%c2, %c0_33] : memref<9x32xf32, #tpu.memory_space<vmem>>, vector<1x32xf32>
    tpu.vector_store %arg4[%c2, %c0_33], %96 {strides = array<i32>} : memref<9x32xf32, #tpu.memory_space<vmem>>, vector<1x32xf32>,
    %cst_34 = arith.constant dense<0.000000e+00> : vector<1x128xf32>
    %98 = tpu.matmul %96, %11, %cst_34 {dimension_numbers = #tpu.dot_dimension_numbers<[1], [0], [0], [1], [0, 0, 1, 1], [], []>} : vector<1x32xf32>, vector<32x128xf32>, vector<1x128xf32> -> vector<1x128xf32>
    %99 = arith.addf %15, %98 : vector<1x128xf32>
    %100 = math.tanh %99 : vector<1x128xf32>
    %101 = vector.extract_strided_slice %100 {offsets = [0, 0], sizes = [1, 32], strides = [1, 1]} : vector<1x128xf32> to vector<1x32xf32>
    %cst_35 = arith.constant 5.000000e-01 : f32
    %102 = vector.broadcast %cst_35 : f32 to vector<1x32xf32>
    %103 = arith.mulf %101, %102 : vector<1x32xf32>
    %cst_36 = arith.constant 5.000000e-01 : f32
    %104 = vector.broadcast %cst_36 : f32 to vector<1x32xf32>
    %105 = arith.addf %103, %104 : vector<1x32xf32>
    %106 = vector.extract_strided_slice %100 {offsets = [0, 32], sizes = [1, 32], strides = [1, 1]} : vector<1x128xf32> to vector<1x32xf32>
    %cst_37 = arith.constant 5.000000e-01 : f32
    %107 = vector.broadcast %cst_37 : f32 to vector<1x32xf32>
    %108 = arith.mulf %106, %107 : vector<1x32xf32>
    %cst_38 = arith.constant 5.000000e-01 : f32
    %109 = vector.broadcast %cst_38 : f32 to vector<1x32xf32>
    %110 = arith.addf %108, %109 : vector<1x32xf32>
    %111 = vector.extract_strided_slice %100 {offsets = [0, 64], sizes = [1, 32], strides = [1, 1]} : vector<1x128xf32> to vector<1x32xf32>
    %112 = vector.extract_strided_slice %100 {offsets = [0, 96], sizes = [1, 32], strides = [1, 1]} : vector<1x128xf32> to vector<1x32xf32>
    %cst_39 = arith.constant 5.000000e-01 : f32
    %113 = vector.broadcast %cst_39 : f32 to vector<1x32xf32>
    %114 = arith.mulf %112, %113 : vector<1x32xf32>
    %cst_40 = arith.constant 5.000000e-01 : f32
    %115 = vector.broadcast %cst_40 : f32 to vector<1x32xf32>
    %116 = arith.addf %114, %115 : vector<1x32xf32>
    %117 = arith.mulf %110, %94 : vector<1x32xf32>
    %118 = arith.mulf %105, %111 : vector<1x32xf32>
    %119 = arith.addf %117, %118 : vector<1x32xf32>
    %120 = math.tanh %119 : vector<1x32xf32>
    %121 = arith.mulf %116, %120 : vector<1x32xf32>
    %c3 = arith.constant 3 : index
    %c0_41 = arith.constant 0 : index
    %122 = vector.load %arg4[%c3, %c0_41] : memref<9x32xf32, #tpu.memory_space<vmem>>, vector<1x32xf32>
    tpu.vector_store %arg4[%c3, %c0_41], %121 {strides = array<i32>} : memref<9x32xf32, #tpu.memory_space<vmem>>, vector<1x32xf32>,
    %cst_42 = arith.constant dense<0.000000e+00> : vector<1x128xf32>
    %123 = tpu.matmul %121, %11, %cst_42 {dimension_numbers = #tpu.dot_dimension_numbers<[1], [0], [0], [1], [0, 0, 1, 1], [], []>} : vector<1x32xf32>, vector<32x128xf32>, vector<1x128xf32> -> vector<1x128xf32>
    %124 = arith.addf %16, %123 : vector<1x128xf32>
    %125 = math.tanh %124 : vector<1x128xf32>
    %126 = vector.extract_strided_slice %125 {offsets = [0, 0], sizes = [1, 32], strides = [1, 1]} : vector<1x128xf32> to vector<1x32xf32>
    %cst_43 = arith.constant 5.000000e-01 : f32
    %127 = vector.broadcast %cst_43 : f32 to vector<1x32xf32>
    %128 = arith.mulf %126, %127 : vector<1x32xf32>
    %cst_44 = arith.constant 5.000000e-01 : f32
    %129 = vector.broadcast %cst_44 : f32 to vector<1x32xf32>
    %130 = arith.addf %128, %129 : vector<1x32xf32>
    %131 = vector.extract_strided_slice %125 {offsets = [0, 32], sizes = [1, 32], strides = [1, 1]} : vector<1x128xf32> to vector<1x32xf32>
    %cst_45 = arith.constant 5.000000e-01 : f32
    %132 = vector.broadcast %cst_45 : f32 to vector<1x32xf32>
    %133 = arith.mulf %131, %132 : vector<1x32xf32>
    %cst_46 = arith.constant 5.000000e-01 : f32
    %134 = vector.broadcast %cst_46 : f32 to vector<1x32xf32>
    %135 = arith.addf %133, %134 : vector<1x32xf32>
    %136 = vector.extract_strided_slice %125 {offsets = [0, 64], sizes = [1, 32], strides = [1, 1]} : vector<1x128xf32> to vector<1x32xf32>
    %137 = vector.extract_strided_slice %125 {offsets = [0, 96], sizes = [1, 32], strides = [1, 1]} : vector<1x128xf32> to vector<1x32xf32>
    %cst_47 = arith.constant 5.000000e-01 : f32
    %138 = vector.broadcast %cst_47 : f32 to vector<1x32xf32>
    %139 = arith.mulf %137, %138 : vector<1x32xf32>
    %cst_48 = arith.constant 5.000000e-01 : f32
    %140 = vector.broadcast %cst_48 : f32 to vector<1x32xf32>
    %141 = arith.addf %139, %140 : vector<1x32xf32>
    %142 = arith.mulf %135, %119 : vector<1x32xf32>
    %143 = arith.mulf %130, %136 : vector<1x32xf32>
    %144 = arith.addf %142, %143 : vector<1x32xf32>
    %145 = math.tanh %144 : vector<1x32xf32>
    %146 = arith.mulf %141, %145 : vector<1x32xf32>
    %c4 = arith.constant 4 : index
    %c0_49 = arith.constant 0 : index
    %147 = vector.load %arg4[%c4, %c0_49] : memref<9x32xf32, #tpu.memory_space<vmem>>, vector<1x32xf32>
    tpu.vector_store %arg4[%c4, %c0_49], %146 {strides = array<i32>} : memref<9x32xf32, #tpu.memory_space<vmem>>, vector<1x32xf32>,
    %cst_50 = arith.constant dense<0.000000e+00> : vector<1x128xf32>
    %148 = tpu.matmul %146, %11, %cst_50 {dimension_numbers = #tpu.dot_dimension_numbers<[1], [0], [0], [1], [0, 0, 1, 1], [], []>} : vector<1x32xf32>, vector<32x128xf32>, vector<1x128xf32> -> vector<1x128xf32>
    %149 = arith.addf %17, %148 : vector<1x128xf32>
    %150 = math.tanh %149 : vector<1x128xf32>
    %151 = vector.extract_strided_slice %150 {offsets = [0, 0], sizes = [1, 32], strides = [1, 1]} : vector<1x128xf32> to vector<1x32xf32>
    %cst_51 = arith.constant 5.000000e-01 : f32
    %152 = vector.broadcast %cst_51 : f32 to vector<1x32xf32>
    %153 = arith.mulf %151, %152 : vector<1x32xf32>
    %cst_52 = arith.constant 5.000000e-01 : f32
    %154 = vector.broadcast %cst_52 : f32 to vector<1x32xf32>
    %155 = arith.addf %153, %154 : vector<1x32xf32>
    %156 = vector.extract_strided_slice %150 {offsets = [0, 32], sizes = [1, 32], strides = [1, 1]} : vector<1x128xf32> to vector<1x32xf32>
    %cst_53 = arith.constant 5.000000e-01 : f32
    %157 = vector.broadcast %cst_53 : f32 to vector<1x32xf32>
    %158 = arith.mulf %156, %157 : vector<1x32xf32>
    %cst_54 = arith.constant 5.000000e-01 : f32
    %159 = vector.broadcast %cst_54 : f32 to vector<1x32xf32>
    %160 = arith.addf %158, %159 : vector<1x32xf32>
    %161 = vector.extract_strided_slice %150 {offsets = [0, 64], sizes = [1, 32], strides = [1, 1]} : vector<1x128xf32> to vector<1x32xf32>
    %162 = vector.extract_strided_slice %150 {offsets = [0, 96], sizes = [1, 32], strides = [1, 1]} : vector<1x128xf32> to vector<1x32xf32>
    %cst_55 = arith.constant 5.000000e-01 : f32
    %163 = vector.broadcast %cst_55 : f32 to vector<1x32xf32>
    %164 = arith.mulf %162, %163 : vector<1x32xf32>
    %cst_56 = arith.constant 5.000000e-01 : f32
    %165 = vector.broadcast %cst_56 : f32 to vector<1x32xf32>
    %166 = arith.addf %164, %165 : vector<1x32xf32>
    %167 = arith.mulf %160, %144 : vector<1x32xf32>
    %168 = arith.mulf %155, %161 : vector<1x32xf32>
    %169 = arith.addf %167, %168 : vector<1x32xf32>
    %170 = math.tanh %169 : vector<1x32xf32>
    %171 = arith.mulf %166, %170 : vector<1x32xf32>
    %c5 = arith.constant 5 : index
    %c0_57 = arith.constant 0 : index
    %172 = vector.load %arg4[%c5, %c0_57] : memref<9x32xf32, #tpu.memory_space<vmem>>, vector<1x32xf32>
    tpu.vector_store %arg4[%c5, %c0_57], %171 {strides = array<i32>} : memref<9x32xf32, #tpu.memory_space<vmem>>, vector<1x32xf32>,
    %cst_58 = arith.constant dense<0.000000e+00> : vector<1x128xf32>
    %173 = tpu.matmul %171, %11, %cst_58 {dimension_numbers = #tpu.dot_dimension_numbers<[1], [0], [0], [1], [0, 0, 1, 1], [], []>} : vector<1x32xf32>, vector<32x128xf32>, vector<1x128xf32> -> vector<1x128xf32>
    %174 = arith.addf %18, %173 : vector<1x128xf32>
    %175 = math.tanh %174 : vector<1x128xf32>
    %176 = vector.extract_strided_slice %175 {offsets = [0, 0], sizes = [1, 32], strides = [1, 1]} : vector<1x128xf32> to vector<1x32xf32>
    %cst_59 = arith.constant 5.000000e-01 : f32
    %177 = vector.broadcast %cst_59 : f32 to vector<1x32xf32>
    %178 = arith.mulf %176, %177 : vector<1x32xf32>
    %cst_60 = arith.constant 5.000000e-01 : f32
    %179 = vector.broadcast %cst_60 : f32 to vector<1x32xf32>
    %180 = arith.addf %178, %179 : vector<1x32xf32>
    %181 = vector.extract_strided_slice %175 {offsets = [0, 32], sizes = [1, 32], strides = [1, 1]} : vector<1x128xf32> to vector<1x32xf32>
    %cst_61 = arith.constant 5.000000e-01 : f32
    %182 = vector.broadcast %cst_61 : f32 to vector<1x32xf32>
    %183 = arith.mulf %181, %182 : vector<1x32xf32>
    %cst_62 = arith.constant 5.000000e-01 : f32
    %184 = vector.broadcast %cst_62 : f32 to vector<1x32xf32>
    %185 = arith.addf %183, %184 : vector<1x32xf32>
    %186 = vector.extract_strided_slice %175 {offsets = [0, 64], sizes = [1, 32], strides = [1, 1]} : vector<1x128xf32> to vector<1x32xf32>
    %187 = vector.extract_strided_slice %175 {offsets = [0, 96], sizes = [1, 32], strides = [1, 1]} : vector<1x128xf32> to vector<1x32xf32>
    %cst_63 = arith.constant 5.000000e-01 : f32
    %188 = vector.broadcast %cst_63 : f32 to vector<1x32xf32>
    %189 = arith.mulf %187, %188 : vector<1x32xf32>
    %cst_64 = arith.constant 5.000000e-01 : f32
    %190 = vector.broadcast %cst_64 : f32 to vector<1x32xf32>
    %191 = arith.addf %189, %190 : vector<1x32xf32>
    %192 = arith.mulf %185, %169 : vector<1x32xf32>
    %193 = arith.mulf %180, %186 : vector<1x32xf32>
    %194 = arith.addf %192, %193 : vector<1x32xf32>
    %195 = math.tanh %194 : vector<1x32xf32>
    %196 = arith.mulf %191, %195 : vector<1x32xf32>
    %c6 = arith.constant 6 : index
    %c0_65 = arith.constant 0 : index
    %197 = vector.load %arg4[%c6, %c0_65] : memref<9x32xf32, #tpu.memory_space<vmem>>, vector<1x32xf32>
    tpu.vector_store %arg4[%c6, %c0_65], %196 {strides = array<i32>} : memref<9x32xf32, #tpu.memory_space<vmem>>, vector<1x32xf32>,
    %cst_66 = arith.constant dense<0.000000e+00> : vector<1x128xf32>
    %198 = tpu.matmul %196, %11, %cst_66 {dimension_numbers = #tpu.dot_dimension_numbers<[1], [0], [0], [1], [0, 0, 1, 1], [], []>} : vector<1x32xf32>, vector<32x128xf32>, vector<1x128xf32> -> vector<1x128xf32>
    %199 = arith.addf %19, %198 : vector<1x128xf32>
    %200 = math.tanh %199 : vector<1x128xf32>
    %201 = vector.extract_strided_slice %200 {offsets = [0, 0], sizes = [1, 32], strides = [1, 1]} : vector<1x128xf32> to vector<1x32xf32>
    %cst_67 = arith.constant 5.000000e-01 : f32
    %202 = vector.broadcast %cst_67 : f32 to vector<1x32xf32>
    %203 = arith.mulf %201, %202 : vector<1x32xf32>
    %cst_68 = arith.constant 5.000000e-01 : f32
    %204 = vector.broadcast %cst_68 : f32 to vector<1x32xf32>
    %205 = arith.addf %203, %204 : vector<1x32xf32>
    %206 = vector.extract_strided_slice %200 {offsets = [0, 32], sizes = [1, 32], strides = [1, 1]} : vector<1x128xf32> to vector<1x32xf32>
    %cst_69 = arith.constant 5.000000e-01 : f32
    %207 = vector.broadcast %cst_69 : f32 to vector<1x32xf32>
    %208 = arith.mulf %206, %207 : vector<1x32xf32>
    %cst_70 = arith.constant 5.000000e-01 : f32
    %209 = vector.broadcast %cst_70 : f32 to vector<1x32xf32>
    %210 = arith.addf %208, %209 : vector<1x32xf32>
    %211 = vector.extract_strided_slice %200 {offsets = [0, 64], sizes = [1, 32], strides = [1, 1]} : vector<1x128xf32> to vector<1x32xf32>
    %212 = vector.extract_strided_slice %200 {offsets = [0, 96], sizes = [1, 32], strides = [1, 1]} : vector<1x128xf32> to vector<1x32xf32>
    %cst_71 = arith.constant 5.000000e-01 : f32
    %213 = vector.broadcast %cst_71 : f32 to vector<1x32xf32>
    %214 = arith.mulf %212, %213 : vector<1x32xf32>
    %cst_72 = arith.constant 5.000000e-01 : f32
    %215 = vector.broadcast %cst_72 : f32 to vector<1x32xf32>
    %216 = arith.addf %214, %215 : vector<1x32xf32>
    %217 = arith.mulf %210, %194 : vector<1x32xf32>
    %218 = arith.mulf %205, %211 : vector<1x32xf32>
    %219 = arith.addf %217, %218 : vector<1x32xf32>
    %220 = math.tanh %219 : vector<1x32xf32>
    %221 = arith.mulf %216, %220 : vector<1x32xf32>
    %c7 = arith.constant 7 : index
    %c0_73 = arith.constant 0 : index
    %222 = vector.load %arg4[%c7, %c0_73] : memref<9x32xf32, #tpu.memory_space<vmem>>, vector<1x32xf32>
    tpu.vector_store %arg4[%c7, %c0_73], %221 {strides = array<i32>} : memref<9x32xf32, #tpu.memory_space<vmem>>, vector<1x32xf32>,
    %cst_74 = arith.constant dense<0.000000e+00> : vector<1x128xf32>
    %223 = tpu.matmul %221, %11, %cst_74 {dimension_numbers = #tpu.dot_dimension_numbers<[1], [0], [0], [1], [0, 0, 1, 1], [], []>} : vector<1x32xf32>, vector<32x128xf32>, vector<1x128xf32> -> vector<1x128xf32>
    %224 = arith.addf %20, %223 : vector<1x128xf32>
    %225 = math.tanh %224 : vector<1x128xf32>
    %226 = vector.extract_strided_slice %225 {offsets = [0, 0], sizes = [1, 32], strides = [1, 1]} : vector<1x128xf32> to vector<1x32xf32>
    %cst_75 = arith.constant 5.000000e-01 : f32
    %227 = vector.broadcast %cst_75 : f32 to vector<1x32xf32>
    %228 = arith.mulf %226, %227 : vector<1x32xf32>
    %cst_76 = arith.constant 5.000000e-01 : f32
    %229 = vector.broadcast %cst_76 : f32 to vector<1x32xf32>
    %230 = arith.addf %228, %229 : vector<1x32xf32>
    %231 = vector.extract_strided_slice %225 {offsets = [0, 32], sizes = [1, 32], strides = [1, 1]} : vector<1x128xf32> to vector<1x32xf32>
    %cst_77 = arith.constant 5.000000e-01 : f32
    %232 = vector.broadcast %cst_77 : f32 to vector<1x32xf32>
    %233 = arith.mulf %231, %232 : vector<1x32xf32>
    %cst_78 = arith.constant 5.000000e-01 : f32
    %234 = vector.broadcast %cst_78 : f32 to vector<1x32xf32>
    %235 = arith.addf %233, %234 : vector<1x32xf32>
    %236 = vector.extract_strided_slice %225 {offsets = [0, 64], sizes = [1, 32], strides = [1, 1]} : vector<1x128xf32> to vector<1x32xf32>
    %237 = vector.extract_strided_slice %225 {offsets = [0, 96], sizes = [1, 32], strides = [1, 1]} : vector<1x128xf32> to vector<1x32xf32>
    %cst_79 = arith.constant 5.000000e-01 : f32
    %238 = vector.broadcast %cst_79 : f32 to vector<1x32xf32>
    %239 = arith.mulf %237, %238 : vector<1x32xf32>
    %cst_80 = arith.constant 5.000000e-01 : f32
    %240 = vector.broadcast %cst_80 : f32 to vector<1x32xf32>
    %241 = arith.addf %239, %240 : vector<1x32xf32>
    %242 = arith.mulf %235, %219 : vector<1x32xf32>
    %243 = arith.mulf %230, %236 : vector<1x32xf32>
    %244 = arith.addf %242, %243 : vector<1x32xf32>
    %245 = math.tanh %244 : vector<1x32xf32>
    %246 = arith.mulf %241, %245 : vector<1x32xf32>
    %c8 = arith.constant 8 : index
    %c0_81 = arith.constant 0 : index
    %247 = vector.load %arg4[%c8, %c0_81] : memref<9x32xf32, #tpu.memory_space<vmem>>, vector<1x32xf32>
    tpu.vector_store %arg4[%c8, %c0_81], %246 {strides = array<i32>} : memref<9x32xf32, #tpu.memory_space<vmem>>, vector<1x32xf32>,
    return
  }
}

</mosaic_0001>

<llo_original>
// kernel: tpu_custom_call.1
$region0: #{tpu_custom_call.1}
  #allocation0 [shape = 'u32[]', space=smem, size = 0x4, offset = 0x4, fixed_abs, tag = 'smem constant byte address 0x4 - core index']
  #allocation1 [shape = 'u32[144,128]{1,0:T(1,128)}', space=vmem, size = 0x12000, scoped, tag = 'internal scratch']
  %s0 = inlined_call_operand.vmem [shape: s32[9,1], index: 0, kind: input, shape index: {}]
  %s1 = inlined_call_operand.vmem [shape: f32[16,128], index: 1, kind: input, shape index: {}]
  %s2 = inlined_call_operand.hbm [shape: f32[32,128], index: 2, kind: input, shape index: {}]
  %s3 = inlined_call_operand.vmem [shape: f32[1,128], index: 3, kind: input, shape index: {}]
  %s4 = inlined_call_operand.hbm [shape: f32[9,32], index: 4, kind: output, shape index: {}]
  %s5 = sld [smem:[#allocation0]]
  $region30: #{tpu_custom_call.1} parent=0
    _
  %s7 = ssub.s32 1, %s5
  %s8 = scalar_select 0, %s7, %s5
  $region1: #{tpu_custom_call.1} parent=0
    #allocation2 [shape = 'u8[16384]{0}', space=vmem, size = 0x4000, scoped, tag = 'input window, operand 2, single buffered']
    #allocation3 [shape = 's32[1]{0}', space=sflag, size = 0x4, scoped, tag = 'scoped memory for tpu_custom_call.1']
    #allocation4 [shape = 's32[1]{0}', space=sflag, size = 0x4, scoped, tag = 'scoped memory for tpu_custom_call.1']
    #allocation5 [shape = 'u8[8192]{0}', space=vmem, size = 0x2000, scoped, tag = 'output window, operand 0, single buffered']
    %9 = vsyncpa [#allocation3], 0
    %10 = vsyncpa [#allocation4], 0
    // Predicated region
    $region2: #{tpu_custom_call.1} parent=1 // pred_check
      _
    $region3: #{tpu_custom_call.1} parent=1 // pred_check_branch
      %12 = sbr.rel (0) target = $region5
    $region4: #{tpu_custom_call.1} parent=1 // pred_region
      _
    $region5: #{tpu_custom_call.1} parent=1 // pred_fallthru
      _
    // Predicated region
    $region6: #{tpu_custom_call.1} parent=1 // pred_check
      _
    $region7: #{tpu_custom_call.1} parent=1 // pred_check_branch
      %14 = sbr.rel (0) target = $region9
    $region8: #{tpu_custom_call.1} parent=1 // pred_region
      _
    $region9: #{tpu_custom_call.1} parent=1 // pred_fallthru
      _
    // Predicated region
    $region10: #{tpu_custom_call.1} parent=1 // pred_check
      _
    $region11: #{tpu_custom_call.1} parent=1 // pred_check_branch
      %16 = sbr.rel (0) target = $region13
    $region12: #{tpu_custom_call.1} parent=1 // pred_region
      %s18 = ssub.s32 512, 512
      %19 = vsyncadd [#allocation3], %s18
      %s20 = sshll.u32 [#allocation2], 4
      %s21 = int_to_ptr.vmem [resolvable:$true] %s20
      %26 = dma.hbm_to_vmem [thread:$0]  %s2, 512, %s21, [#allocation3], 128, 128, 8
    $region13: #{tpu_custom_call.1} parent=1 // pred_fallthru
      _
    // Predicated region
    $region14: #{tpu_custom_call.1} parent=1 // pred_check
      _
    $region15: #{tpu_custom_call.1} parent=1 // pred_check_branch
      %28 = sbr.rel (0) target = $region17
    $region16: #{tpu_custom_call.1} parent=1 // pred_region
      _
    $region17: #{tpu_custom_call.1} parent=1 // pred_fallthru
      _
    // Predicated region
    $region18: #{tpu_custom_call.1} parent=1 // pred_check
      _
    $region19: #{tpu_custom_call.1} parent=1 // pred_check_branch
      %30 = sbr.rel (0) target = $region21
    $region20: #{tpu_custom_call.1} parent=1 // pred_region
      %31 = dma.done [#allocation3], 512
    $region21: #{tpu_custom_call.1} parent=1 // pred_fallthru
      _
    %v32 = vlaneseq
    %v33 = vand.u32 %v32, 127
    %v34 = vld [vmem:[%s0] sm:$0xff]
    %v35 = vld [vmem:[%s0 + $0x8] sm:$0x1]
    %36 = vset.pattern.permute.xlu0 0
    %37 = vperm.xlu0 %36, %v34
    %v38 = vpop.permute.xlu0 %37
    %39 = vset.pattern.permute.xlu0 0
    %40 = vperm.xlu0 %39, %v35
    %v41 = vpop.permute.xlu0 %40
    %vm42 = vcmp.eq.s32.totalorder %v33, %v38
    %vm43 = vcmp.eq.s32.totalorder %v33, %v41
    %v44 = vsel %vm42, 1, 0
    %v45 = vsel %vm43, 1, 0
    %v46 = vcvt.s32.f32 %v44
    %v47 = vcvt.s32.f32 %v45
    %v48 = vld [vmem:[%s1] sm:$0xff]
    %v49 = vld [vmem:[%s1 + $0x8] sm:$0xff]
    %v50 = vld [vmem:[%s3] sm:$0x1]
    %v52 = vlaneseq
    %v53 = vshrl.u32 %v52, 7
    %v54 = vsub.s32 0, %v53
    %v55 = vrot.slane %v50, %v54
    %vm57 = vcmask 130048
    %v59 = vsel %vm57, %v46, 0
    %v62 = vsel %vm57, %v47, 0
    %64 = vmatprep.subr.mxu0 0.0
    %65 = vmatpush1.msra.mxu0 %v48
    %66 = vmatprep.subr.mxu0 0.0
    %67 = vmatpush1.msra.mxu0 %v49
    %68 = vmatprep.subr.mxu0 0.0
    %69 = vmatpush1.msra.mxu0 0.0
    %70 = vmatprep.subr.mxu0 0.0
    %71 = vmatpush1.msra.mxu0 0.0
    %72 = vmatprep.subr.mxu0 0.0
    %73 = vmatpush1.msra.mxu0 0.0
    %74 = vmatprep.subr.mxu0 0.0
    %75 = vmatpush1.msra.mxu0 0.0
    %76 = vmatprep.subr.mxu0 0.0
    %77 = vmatpush1.msra.mxu0 0.0
    %78 = vmatprep.subr.mxu0 0.0
    %79 = vmatpush1.msra.mxu0 0.0
    %80 = vmatprep.subr.mxu0 0.0
    %81 = vmatpush1.msra.mxu0 0.0
    %82 = vmatprep.subr.mxu0 0.0
    %83 = vmatpush1.msra.mxu0 0.0
    %84 = vmatprep.subr.mxu0 0.0
    %85 = vmatpush1.msra.mxu0 0.0
    %86 = vmatprep.subr.mxu0 0.0
    %87 = vmatpush1.msra.mxu0 0.0
    %88 = vmatprep.subr.mxu0 0.0
    %89 = vmatpush1.msra.mxu0 0.0
    %90 = vmatprep.subr.mxu0 0.0
    %91 = vmatpush1.msra.mxu0 0.0
    %92 = vmatprep.subr.mxu0 0.0
    %93 = vmatpush1.msra.mxu0 0.0
    %94 = vmatprep.subr.mxu0 0.0
    %95 = vmatpush1.msra.mxu0 0.0
    %96 = vmatprep.subr.mxu0 0.0
    %97 = vmatpush1.msra.mxu0 0.0
    %98 = vmatprep.subr.mxu0 0.0
    %99 = vmatpush1.msra.mxu0 0.0
    %100 = vmatprep.subr.mxu0 0.0
    %101 = vmatpush1.msra.mxu0 0.0
    %102 = vmatprep.subr.mxu0 0.0
    %103 = vmatpush1.msra.mxu0 0.0
    %104 = vmatprep.subr.mxu0 0.0
    %105 = vmatpush1.msra.mxu0 0.0
    %106 = vmatprep.subr.mxu0 0.0
    %107 = vmatpush1.msra.mxu0 0.0
    %108 = vmatprep.subr.mxu0 0.0
    %109 = vmatpush1.msra.mxu0 0.0
    %110 = vmatprep.subr.mxu0 0.0
    %111 = vmatpush1.msra.mxu0 0.0
    %112 = vmatprep.subr.mxu0 0.0
    %113 = vmatpush1.msra.mxu0 0.0
    %114 = vmatprep.subr.mxu0 0.0
    %115 = vmatpush1.msra.mxu0 0.0
    %116 = vmatprep.subr.mxu0 0.0
    %117 = vmatpush1.msra.mxu0 0.0
    %118 = vmatprep.subr.mxu0 0.0
    %119 = vmatpush1.msra.mxu0 0.0
    %120 = vmatprep.subr.mxu0 0.0
    %121 = vmatpush1.msra.mxu0 0.0
    %122 = vmatprep.subr.mxu0 0.0
    %123 = vmatpush1.msra.mxu0 0.0
    %124 = vmatprep.subr.mxu0 0.0
    %125 = vmatpush1.msra.mxu0 0.0
    %126 = vmatprep.subr.mxu0 0.0
    %127 = vmatpush1.msra.mxu0 0.0
    %128 = vmatprep.mubr.f32.mxu0 0.0
    %129 = vmatmul.mubr.f32.gmra.mrb[0].mxu0 %v59
    %v130 = vpop.f32.mrb[0].mxu0
    %v131 = vadd.f32 %v55, %v130
    %v132 = vpop.f32.mrb[0].mxu0
    %133 = vmatprep.mubr.f32.mxu0 0.0
    %134 = vmatmul.mubr.f32.gmra.mrb[0].mxu0 %v62
    %v135 = vpop.f32.mrb[0].mxu0
    %v136 = vadd.f32 %v55, %v135
    %v137 = vpop.f32.mrb[0].mxu0
    %138 = vdwg.mxu0
    %v139 = vld [vmem:[#allocation2] sm:$0xff]
    %v140 = vld [vmem:[#allocation2 + $0x8] sm:$0xff]
    %v141 = vld [vmem:[#allocation2 + $0x10] sm:$0xff]
    %v142 = vld [vmem:[#allocation2 + $0x18] sm:$0xff]
    %vm143 = vcmask 261120
    %v145 = vsel %vm143, 0.0, 0
    %147 = vmatprep.subr.mxu0 0.0
    %148 = vmatpush1.msra.mxu0 %v139
    %149 = vmatprep.subr.mxu0 0.0
    %150 = vmatpush1.msra.mxu0 %v140
    %151 = vmatprep.subr.mxu0 0.0
    %152 = vmatpush1.msra.mxu0 %v141
    %153 = vmatprep.subr.mxu0 0.0
    %154 = vmatpush1.msra.mxu0 %v142
    %155 = vmatprep.subr.mxu0 0.0
    %156 = vmatpush1.msra.mxu0 0.0
    %157 = vmatprep.subr.mxu0 0.0
    %158 = vmatpush1.msra.mxu0 0.0
    %159 = vmatprep.subr.mxu0 0.0
    %160 = vmatpush1.msra.mxu0 0.0
    %161 = vmatprep.subr.mxu0 0.0
    %162 = vmatpush1.msra.mxu0 0.0
    %163 = vmatprep.subr.mxu0 0.0
    %164 = vmatpush1.msra.mxu0 0.0
    %165 = vmatprep.subr.mxu0 0.0
    %166 = vmatpush1.msra.mxu0 0.0
    %167 = vmatprep.subr.mxu0 0.0
    %168 = vmatpush1.msra.mxu0 0.0
    %169 = vmatprep.subr.mxu0 0.0
    %170 = vmatpush1.msra.mxu0 0.0
    %171 = vmatprep.subr.mxu0 0.0
    %172 = vmatpush1.msra.mxu0 0.0
    %173 = vmatprep.subr.mxu0 0.0
    %174 = vmatpush1.msra.mxu0 0.0
    %175 = vmatprep.subr.mxu0 0.0
    %176 = vmatpush1.msra.mxu0 0.0
    %177 = vmatprep.subr.mxu0 0.0
    %178 = vmatpush1.msra.mxu0 0.0
    %179 = vmatprep.subr.mxu0 0.0
    %180 = vmatpush1.msra.mxu0 0.0
    %181 = vmatprep.subr.mxu0 0.0
    %182 = vmatpush1.msra.mxu0 0.0
    %183 = vmatprep.subr.mxu0 0.0
    %184 = vmatpush1.msra.mxu0 0.0
    %185 = vmatprep.subr.mxu0 0.0
    %186 = vmatpush1.msra.mxu0 0.0
    %187 = vmatprep.subr.mxu0 0.0
    %188 = vmatpush1.msra.mxu0 0.0
    %189 = vmatprep.subr.mxu0 0.0
    %190 = vmatpush1.msra.mxu0 0.0
    %191 = vmatprep.subr.mxu0 0.0
    %192 = vmatpush1.msra.mxu0 0.0
    %193 = vmatprep.subr.mxu0 0.0
    %194 = vmatpush1.msra.mxu0 0.0
    %195 = vmatprep.subr.mxu0 0.0
    %196 = vmatpush1.msra.mxu0 0.0
    %197 = vmatprep.subr.mxu0 0.0
    %198 = vmatpush1.msra.mxu0 0.0
    %199 = vmatprep.subr.mxu0 0.0
    %200 = vmatpush1.msra.mxu0 0.0
    %201 = vmatprep.subr.mxu0 0.0
    %202 = vmatpush1.msra.mxu0 0.0
    %203 = vmatprep.subr.mxu0 0.0
    %204 = vmatpush1.msra.mxu0 0.0
    %205 = vmatprep.subr.mxu0 0.0
    %206 = vmatpush1.msra.mxu0 0.0
    %207 = vmatprep.subr.mxu0 0.0
    %208 = vmatpush1.msra.mxu0 0.0
    %209 = vmatprep.subr.mxu0 0.0
    %210 = vmatpush1.msra.mxu0 0.0
    %211 = vmatprep.mubr.f32.mxu0 0.0
    %212 = vmatmul.mubr.f32.gmra.mrb[0].mxu0 %v145
    %v213 = vpop.f32.mrb[0].mxu0
    %v214 = vadd.f32 0.0, %v213
    %v215 = vpop.f32.mrb[0].mxu0
    %216 = vdwg.mxu0
    %v217 = vadd.f32 %v131, %v214
    %v218 = vtanh.pop %v217
    %v219 = vmul.f32 %v218, 0.5
    %v220 = vadd.f32 %v219, 0.5
    %v221 = vmul.f32 %v220, 0.0
    %223 = vrot.lane.b32.xlu0 %v218, 64
    %v224 = vpop.permute.xlu0 %223
    %v226 = vmul.f32 %v220, %v224
    %228 = vrot.lane.b32.xlu0 %v226, 32
    %v229 = vpop.permute.xlu0 %228
    %v231 = vadd.f32 %v221, %v229
    %v232 = vtanh.pop %v231
    %234 = vrot.lane.b32.xlu0 %v232, 64
    %v235 = vpop.permute.xlu0 %234
    %v237 = vmul.f32 %v220, %v235
    %239 = vrot.lane.b32.xlu0 %v237, 32
    %v240 = vpop.permute.xlu0 %239
    %vm242 = vcmask 253952
    %243 = vst.msk [vmem:[#allocation5] sm:$0x1] %vm242, %v240
    %v244 = vsel %vm143, %v240, 0
    %246 = vmatprep.subr.mxu0 0.0
    %247 = vmatpush1.msra.mxu0 %v139
    %248 = vmatprep.subr.mxu0 0.0
    %249 = vmatpush1.msra.mxu0 %v140
    %250 = vmatprep.subr.mxu0 0.0
    %251 = vmatpush1.msra.mxu0 %v141
    %252 = vmatprep.subr.mxu0 0.0
    %253 = vmatpush1.msra.mxu0 %v142
    %254 = vmatprep.subr.mxu0 0.0
    %255 = vmatpush1.msra.mxu0 0.0
    %256 = vmatprep.subr.mxu0 0.0
    %257 = vmatpush1.msra.mxu0 0.0
    %258 = vmatprep.subr.mxu0 0.0
    %259 = vmatpush1.msra.mxu0 0.0
    %260 = vmatprep.subr.mxu0 0.0
    %261 = vmatpush1.msra.mxu0 0.0
    %262 = vmatprep.subr.mxu0 0.0
    %263 = vmatpush1.msra.mxu0 0.0
    %264 = vmatprep.subr.mxu0 0.0
    %265 = vmatpush1.msra.mxu0 0.0
    %266 = vmatprep.subr.mxu0 0.0
    %267 = vmatpush1.msra.mxu0 0.0
    %268 = vmatprep.subr.mxu0 0.0
    %269 = vmatpush1.msra.mxu0 0.0
    %270 = vmatprep.subr.mxu0 0.0
    %271 = vmatpush1.msra.mxu0 0.0
    %272 = vmatprep.subr.mxu0 0.0
    %273 = vmatpush1.msra.mxu0 0.0
    %274 = vmatprep.subr.mxu0 0.0
    %275 = vmatpush1.msra.mxu0 0.0
    %276 = vmatprep.subr.mxu0 0.0
    %277 = vmatpush1.msra.mxu0 0.0
    %278 = vmatprep.subr.mxu0 0.0
    %279 = vmatpush1.msra.mxu0 0.0
    %280 = vmatprep.subr.mxu0 0.0
    %281 = vmatpush1.msra.mxu0 0.0
    %282 = vmatprep.subr.mxu0 0.0
    %283 = vmatpush1.msra.mxu0 0.0
    %284 = vmatprep.subr.mxu0 0.0
    %285 = vmatpush1.msra.mxu0 0.0
    %286 = vmatprep.subr.mxu0 0.0
    %287 = vmatpush1.msra.mxu0 0.0
    %288 = vmatprep.subr.mxu0 0.0
    %289 = vmatpush1.msra.mxu0 0.0
    %290 = vmatprep.subr.mxu0 0.0
    %291 = vmatpush1.msra.mxu0 0.0
    %292 = vmatprep.subr.mxu0 0.0
    %293 = vmatpush1.msra.mxu0 0.0
    %294 = vmatprep.subr.mxu0 0.0
    %295 = vmatpush1.msra.mxu0 0.0
    %296 = vmatprep.subr.mxu0 0.0
    %297 = vmatpush1.msra.mxu0 0.0
    %298 = vmatprep.subr.mxu0 0.0
    %299 = vmatpush1.msra.mxu0 0.0
    %300 = vmatprep.subr.mxu0 0.0
    %301 = vmatpush1.msra.mxu0 0.0
    %302 = vmatprep.subr.mxu0 0.0
    %303 = vmatpush1.msra.mxu0 0.0
    %304 = vmatprep.subr.mxu0 0.0
    %305 = vmatpush1.msra.mxu0 0.0
    %306 = vmatprep.subr.mxu0 0.0
    %307 = vmatpush1.msra.mxu0 0.0
    %308 = vmatprep.subr.mxu0 0.0
    %309 = vmatpush1.msra.mxu0 0.0
    %310 = vmatprep.mubr.f32.mxu0 0.0
    %311 = vmatmul.mubr.f32.gmra.mrb[0].mxu0 %v244
    %v312 = vpop.f32.mrb[0].mxu0
    %v313 = vadd.f32 0.0, %v312
    %v314 = vpop.f32.mrb[0].mxu0
    %315 = vdwg.mxu0
    %v317 = vrot.slane %v313, 7
    %v319 = vadd.f32 %v131, %v317
    %v320 = vtanh.pop %v319
    %v321 = vmul.f32 %v320, 0.5
    %v322 = vadd.f32 %v321, 0.5
    %v324 = vrot.slane %v231, 7
    %v326 = vmul.f32 %v322, %v324
    %328 = vrot.lane.b32.xlu0 %v320, 64
    %v329 = vpop.permute.xlu0 %328
    %v331 = vmul.f32 %v322, %v329
    %333 = vrot.lane.b32.xlu0 %v331, 32
    %v334 = vpop.permute.xlu0 %333
    %v336 = vadd.f32 %v326, %v334
    %v337 = vtanh.pop %v336
    %339 = vrot.lane.b32.xlu0 %v337, 64
    %v340 = vpop.permute.xlu0 %339
    %v342 = vmul.f32 %v322, %v340
    %344 = vrot.lane.b32.xlu0 %v342, 32
    %v345 = vpop.permute.xlu0 %344
    %vm347 = vcmask 254977
    %348 = vst.msk [vmem:[#allocation5] sm:$0x2] %vm347, %v345
    %v349 = vrot.slane %v342, 1
    %350 = vrot.lane.b32.xlu0 %v349, 32
    %v351 = vpop.permute.xlu0 %350
    %v352 = vsel %vm143, %v351, 0
    %354 = vmatprep.subr.mxu0 0.0
    %355 = vmatpush1.msra.mxu0 %v139
    %356 = vmatprep.subr.mxu0 0.0
    %357 = vmatpush1.msra.mxu0 %v140
    %358 = vmatprep.subr.mxu0 0.0
    %359 = vmatpush1.msra.mxu0 %v141
    %360 = vmatprep.subr.mxu0 0.0
    %361 = vmatpush1.msra.mxu0 %v142
    %362 = vmatprep.subr.mxu0 0.0
    %363 = vmatpush1.msra.mxu0 0.0
    %364 = vmatprep.subr.mxu0 0.0
    %365 = vmatpush1.msra.mxu0 0.0
    %366 = vmatprep.subr.mxu0 0.0
    %367 = vmatpush1.msra.mxu0 0.0
    %368 = vmatprep.subr.mxu0 0.0
    %369 = vmatpush1.msra.mxu0 0.0
    %370 = vmatprep.subr.mxu0 0.0
    %371 = vmatpush1.msra.mxu0 0.0
    %372 = vmatprep.subr.mxu0 0.0
    %373 = vmatpush1.msra.mxu0 0.0
    %374 = vmatprep.subr.mxu0 0.0
    %375 = vmatpush1.msra.mxu0 0.0
    %376 = vmatprep.subr.mxu0 0.0
    %377 = vmatpush1.msra.mxu0 0.0
    %378 = vmatprep.subr.mxu0 0.0
    %379 = vmatpush1.msra.mxu0 0.0
    %380 = vmatprep.subr.mxu0 0.0
    %381 = vmatpush1.msra.mxu0 0.0
    %382 = vmatprep.subr.mxu0 0.0
    %383 = vmatpush1.msra.mxu0 0.0
    %384 = vmatprep.subr.mxu0 0.0
    %385 = vmatpush1.msra.mxu0 0.0
    %386 = vmatprep.subr.mxu0 0.0
    %387 = vmatpush1.msra.mxu0 0.0
    %388 = vmatprep.subr.mxu0 0.0
    %389 = vmatpush1.msra.mxu0 0.0
    %390 = vmatprep.subr.mxu0 0.0
    %391 = vmatpush1.msra.mxu0 0.0
    %392 = vmatprep.subr.mxu0 0.0
    %393 = vmatpush1.msra.mxu0 0.0
    %394 = vmatprep.subr.mxu0 0.0
    %395 = vmatpush1.msra.mxu0 0.0
    %396 = vmatprep.subr.mxu0 0.0
    %397 = vmatpush1.msra.mxu0 0.0
    %398 = vmatprep.subr.mxu0 0.0
    %399 = vmatpush1.msra.mxu0 0.0
    %400 = vmatprep.subr.mxu0 0.0
    %401 = vmatpush1.msra.mxu0 0.0
    %402 = vmatprep.subr.mxu0 0.0
    %403 = vmatpush1.msra.mxu0 0.0
    %404 = vmatprep.subr.mxu0 0.0
    %405 = vmatpush1.msra.mxu0 0.0
    %406 = vmatprep.subr.mxu0 0.0
    %407 = vmatpush1.msra.mxu0 0.0
    %408 = vmatprep.subr.mxu0 0.0
    %409 = vmatpush1.msra.mxu0 0.0
    %410 = vmatprep.subr.mxu0 0.0
    %411 = vmatpush1.msra.mxu0 0.0
    %412 = vmatprep.subr.mxu0 0.0
    %413 = vmatpush1.msra.mxu0 0.0
    %414 = vmatprep.subr.mxu0 0.0
    %415 = vmatpush1.msra.mxu0 0.0
    %416 = vmatprep.subr.mxu0 0.0
    %417 = vmatpush1.msra.mxu0 0.0
    %418 = vmatprep.mubr.f32.mxu0 0.0
    %419 = vmatmul.mubr.f32.gmra.mrb[0].mxu0 %v352
    %v420 = vpop.f32.mrb[0].mxu0
    %v421 = vadd.f32 0.0, %v420
    %v422 = vpop.f32.mrb[0].mxu0
    %423 = vdwg.mxu0
    %v425 = vrot.slane %v421, 6
    %v427 = vadd.f32 %v131, %v425
    %v428 = vtanh.pop %v427
    %v429 = vmul.f32 %v428, 0.5
    %v430 = vadd.f32 %v429, 0.5
    %v432 = vrot.slane %v336, 7
    %v434 = vmul.f32 %v430, %v432
    %436 = vrot.lane.b32.xlu0 %v428, 64
    %v437 = vpop.permute.xlu0 %436
    %v439 = vmul.f32 %v430, %v437
    %441 = vrot.lane.b32.xlu0 %v439, 32
    %v442 = vpop.permute.xlu0 %441
    %v444 = vadd.f32 %v434, %v442
    %v445 = vtanh.pop %v444
    %447 = vrot.lane.b32.xlu0 %v445, 64
    %v448 = vpop.permute.xlu0 %447
    %v450 = vmul.f32 %v430, %v448
    %452 = vrot.lane.b32.xlu0 %v450, 32
    %v453 = vpop.permute.xlu0 %452
    %vm455 = vcmask 256002
    %456 = vst.msk [vmem:[#allocation5] sm:$0x4] %vm455, %v453
    %v457 = vrot.slane %v450, 2
    %458 = vrot.lane.b32.xlu0 %v457, 32
    %v459 = vpop.permute.xlu0 %458
    %v460 = vsel %vm143, %v459, 0
    %462 = vmatprep.subr.mxu0 0.0
    %463 = vmatpush1.msra.mxu0 %v139
    %464 = vmatprep.subr.mxu0 0.0
    %465 = vmatpush1.msra.mxu0 %v140
    %466 = vmatprep.subr.mxu0 0.0
    %467 = vmatpush1.msra.mxu0 %v141
    %468 = vmatprep.subr.mxu0 0.0
    %469 = vmatpush1.msra.mxu0 %v142
    %470 = vmatprep.subr.mxu0 0.0
    %471 = vmatpush1.msra.mxu0 0.0
    %472 = vmatprep.subr.mxu0 0.0
    %473 = vmatpush1.msra.mxu0 0.0
    %474 = vmatprep.subr.mxu0 0.0
    %475 = vmatpush1.msra.mxu0 0.0
    %476 = vmatprep.subr.mxu0 0.0
    %477 = vmatpush1.msra.mxu0 0.0
    %478 = vmatprep.subr.mxu0 0.0
    %479 = vmatpush1.msra.mxu0 0.0
    %480 = vmatprep.subr.mxu0 0.0
    %481 = vmatpush1.msra.mxu0 0.0
    %482 = vmatprep.subr.mxu0 0.0
    %483 = vmatpush1.msra.mxu0 0.0
    %484 = vmatprep.subr.mxu0 0.0
    %485 = vmatpush1.msra.mxu0 0.0
    %486 = vmatprep.subr.mxu0 0.0
    %487 = vmatpush1.msra.mxu0 0.0
    %488 = vmatprep.subr.mxu0 0.0
    %489 = vmatpush1.msra.mxu0 0.0
    %490 = vmatprep.subr.mxu0 0.0
    %491 = vmatpush1.msra.mxu0 0.0
    %492 = vmatprep.subr.mxu0 0.0
    %493 = vmatpush1.msra.mxu0 0.0
    %494 = vmatprep.subr.mxu0 0.0
    %495 = vmatpush1.msra.mxu0 0.0
    %496 = vmatprep.subr.mxu0 0.0
    %497 = vmatpush1.msra.mxu0 0.0
    %498 = vmatprep.subr.mxu0 0.0
    %499 = vmatpush1.msra.mxu0 0.0
    %500 = vmatprep.subr.mxu0 0.0
    %501 = vmatpush1.msra.mxu0 0.0
    %502 = vmatprep.subr.mxu0 0.0
    %503 = vmatpush1.msra.mxu0 0.0
    %504 = vmatprep.subr.mxu0 0.0
    %505 = vmatpush1.msra.mxu0 0.0
    %506 = vmatprep.subr.mxu0 0.0
    %507 = vmatpush1.msra.mxu0 0.0
    %508 = vmatprep.subr.mxu0 0.0
    %509 = vmatpush1.msra.mxu0 0.0
    %510 = vmatprep.subr.mxu0 0.0
    %511 = vmatpush1.msra.mxu0 0.0
    %512 = vmatprep.subr.mxu0 0.0
    %513 = vmatpush1.msra.mxu0 0.0
    %514 = vmatprep.subr.mxu0 0.0
    %515 = vmatpush1.msra.mxu0 0.0
    %516 = vmatprep.subr.mxu0 0.0
    %517 = vmatpush1.msra.mxu0 0.0
    %518 = vmatprep.subr.mxu0 0.0
    %519 = vmatpush1.msra.mxu0 0.0
    %520 = vmatprep.subr.mxu0 0.0
    %521 = vmatpush1.msra.mxu0 0.0
    %522 = vmatprep.subr.mxu0 0.0
    %523 = vmatpush1.msra.mxu0 0.0
    %524 = vmatprep.subr.mxu0 0.0
    %525 = vmatpush1.msra.mxu0 0.0
    %526 = vmatprep.mubr.f32.mxu0 0.0
    %527 = vmatmul.mubr.f32.gmra.mrb[0].mxu0 %v460
    %v528 = vpop.f32.mrb[0].mxu0
    %v529 = vadd.f32 0.0, %v528
    %v530 = vpop.f32.mrb[0].mxu0
    %531 = vdwg.mxu0
    %v533 = vrot.slane %v529, 5
    %v535 = vadd.f32 %v131, %v533
    %v536 = vtanh.pop %v535
    %v537 = vmul.f32 %v536, 0.5
    %v538 = vadd.f32 %v537, 0.5
    %v540 = vrot.slane %v444, 7
    %v542 = vmul.f32 %v538, %v540
    %544 = vrot.lane.b32.xlu0 %v536, 64
    %v545 = vpop.permute.xlu0 %544
    %v547 = vmul.f32 %v538, %v545
    %549 = vrot.lane.b32.xlu0 %v547, 32
    %v550 = vpop.permute.xlu0 %549
    %v552 = vadd.f32 %v542, %v550
    %v553 = vtanh.pop %v552
    %555 = vrot.lane.b32.xlu0 %v553, 64
    %v556 = vpop.permute.xlu0 %555
    %v558 = vmul.f32 %v538, %v556
    %560 = vrot.lane.b32.xlu0 %v558, 32
    %v561 = vpop.permute.xlu0 %560
    %vm563 = vcmask 257027
    %564 = vst.msk [vmem:[#allocation5] sm:$0x8] %vm563, %v561
    %v565 = vrot.slane %v558, 3
    %566 = vrot.lane.b32.xlu0 %v565, 32
    %v567 = vpop.permute.xlu0 %566
    %v568 = vsel %vm143, %v567, 0
    %570 = vmatprep.subr.mxu0 0.0
    %571 = vmatpush1.msra.mxu0 %v139
    %572 = vmatprep.subr.mxu0 0.0
    %573 = vmatpush1.msra.mxu0 %v140
    %574 = vmatprep.subr.mxu0 0.0
    %575 = vmatpush1.msra.mxu0 %v141
    %576 = vmatprep.subr.mxu0 0.0
    %577 = vmatpush1.msra.mxu0 %v142
    %578 = vmatprep.subr.mxu0 0.0
    %579 = vmatpush1.msra.mxu0 0.0
    %580 = vmatprep.subr.mxu0 0.0
    %581 = vmatpush1.msra.mxu0 0.0
    %582 = vmatprep.subr.mxu0 0.0
    %583 = vmatpush1.msra.mxu0 0.0
    %584 = vmatprep.subr.mxu0 0.0
    %585 = vmatpush1.msra.mxu0 0.0
    %586 = vmatprep.subr.mxu0 0.0
    %587 = vmatpush1.msra.mxu0 0.0
    %588 = vmatprep.subr.mxu0 0.0
    %589 = vmatpush1.msra.mxu0 0.0
    %590 = vmatprep.subr.mxu0 0.0
    %591 = vmatpush1.msra.mxu0 0.0
    %592 = vmatprep.subr.mxu0 0.0
    %593 = vmatpush1.msra.mxu0 0.0
    %594 = vmatprep.subr.mxu0 0.0
    %595 = vmatpush1.msra.mxu0 0.0
    %596 = vmatprep.subr.mxu0 0.0
    %597 = vmatpush1.msra.mxu0 0.0
    %598 = vmatprep.subr.mxu0 0.0
    %599 = vmatpush1.msra.mxu0 0.0
    %600 = vmatprep.subr.mxu0 0.0
    %601 = vmatpush1.msra.mxu0 0.0
    %602 = vmatprep.subr.mxu0 0.0
    %603 = vmatpush1.msra.mxu0 0.0
    %604 = vmatprep.subr.mxu0 0.0
    %605 = vmatpush1.msra.mxu0 0.0
    %606 = vmatprep.subr.mxu0 0.0
    %607 = vmatpush1.msra.mxu0 0.0
    %608 = vmatprep.subr.mxu0 0.0
    %609 = vmatpush1.msra.mxu0 0.0
    %610 = vmatprep.subr.mxu0 0.0
    %611 = vmatpush1.msra.mxu0 0.0
    %612 = vmatprep.subr.mxu0 0.0
    %613 = vmatpush1.msra.mxu0 0.0
    %614 = vmatprep.subr.mxu0 0.0
    %615 = vmatpush1.msra.mxu0 0.0
    %616 = vmatprep.subr.mxu0 0.0
    %617 = vmatpush1.msra.mxu0 0.0
    %618 = vmatprep.subr.mxu0 0.0
    %619 = vmatpush1.msra.mxu0 0.0
    %620 = vmatprep.subr.mxu0 0.0
    %621 = vmatpush1.msra.mxu0 0.0
    %622 = vmatprep.subr.mxu0 0.0
    %623 = vmatpush1.msra.mxu0 0.0
    %624 = vmatprep.subr.mxu0 0.0
    %625 = vmatpush1.msra.mxu0 0.0
    %626 = vmatprep.subr.mxu0 0.0
    %627 = vmatpush1.msra.mxu0 0.0
    %628 = vmatprep.subr.mxu0 0.0
    %629 = vmatpush1.msra.mxu0 0.0
    %630 = vmatprep.subr.mxu0 0.0
    %631 = vmatpush1.msra.mxu0 0.0
    %632 = vmatprep.subr.mxu0 0.0
    %633 = vmatpush1.msra.mxu0 0.0
    %634 = vmatprep.mubr.f32.mxu0 0.0
    %635 = vmatmul.mubr.f32.gmra.mrb[0].mxu0 %v568
    %v636 = vpop.f32.mrb[0].mxu0
    %v637 = vadd.f32 0.0, %v636
    %v638 = vpop.f32.mrb[0].mxu0
    %639 = vdwg.mxu0
    %v641 = vrot.slane %v637, 4
    %v643 = vadd.f32 %v131, %v641
    %v644 = vtanh.pop %v643
    %v645 = vmul.f32 %v644, 0.5
    %v646 = vadd.f32 %v645, 0.5
    %v648 = vrot.slane %v552, 7
    %v650 = vmul.f32 %v646, %v648
    %652 = vrot.lane.b32.xlu0 %v644, 64
    %v653 = vpop.permute.xlu0 %652
    %v655 = vmul.f32 %v646, %v653
    %657 = vrot.lane.b32.xlu0 %v655, 32
    %v658 = vpop.permute.xlu0 %657
    %v660 = vadd.f32 %v650, %v658
    %v661 = vtanh.pop %v660
    %663 = vrot.lane.b32.xlu0 %v661, 64
    %v664 = vpop.permute.xlu0 %663
    %v666 = vmul.f32 %v646, %v664
    %668 = vrot.lane.b32.xlu0 %v666, 32
    %v669 = vpop.permute.xlu0 %668
    %vm671 = vcmask 258052
    %672 = vst.msk [vmem:[#allocation5] sm:$0x10] %vm671, %v669
    %v673 = vrot.slane %v666, 4
    %674 = vrot.lane.b32.xlu0 %v673, 32
    %v675 = vpop.permute.xlu0 %674
    %v676 = vsel %vm143, %v675, 0
    %678 = vmatprep.subr.mxu0 0.0
    %679 = vmatpush1.msra.mxu0 %v139
    %680 = vmatprep.subr.mxu0 0.0
    %681 = vmatpush1.msra.mxu0 %v140
    %682 = vmatprep.subr.mxu0 0.0
    %683 = vmatpush1.msra.mxu0 %v141
    %684 = vmatprep.subr.mxu0 0.0
    %685 = vmatpush1.msra.mxu0 %v142
    %686 = vmatprep.subr.mxu0 0.0
    %687 = vmatpush1.msra.mxu0 0.0
    %688 = vmatprep.subr.mxu0 0.0
    %689 = vmatpush1.msra.mxu0 0.0
    %690 = vmatprep.subr.mxu0 0.0
    %691 = vmatpush1.msra.mxu0 0.0
    %692 = vmatprep.subr.mxu0 0.0
    %693 = vmatpush1.msra.mxu0 0.0
    %694 = vmatprep.subr.mxu0 0.0
    %695 = vmatpush1.msra.mxu0 0.0
    %696 = vmatprep.subr.mxu0 0.0
    %697 = vmatpush1.msra.mxu0 0.0
    %698 = vmatprep.subr.mxu0 0.0
    %699 = vmatpush1.msra.mxu0 0.0
    %700 = vmatprep.subr.mxu0 0.0
    %701 = vmatpush1.msra.mxu0 0.0
    %702 = vmatprep.subr.mxu0 0.0
    %703 = vmatpush1.msra.mxu0 0.0
    %704 = vmatprep.subr.mxu0 0.0
    %705 = vmatpush1.msra.mxu0 0.0
    %706 = vmatprep.subr.mxu0 0.0
    %707 = vmatpush1.msra.mxu0 0.0
    %708 = vmatprep.subr.mxu0 0.0
    %709 = vmatpush1.msra.mxu0 0.0
    %710 = vmatprep.subr.mxu0 0.0
    %711 = vmatpush1.msra.mxu0 0.0
    %712 = vmatprep.subr.mxu0 0.0
    %713 = vmatpush1.msra.mxu0 0.0
    %714 = vmatprep.subr.mxu0 0.0
    %715 = vmatpush1.msra.mxu0 0.0
    %716 = vmatprep.subr.mxu0 0.0
    %717 = vmatpush1.msra.mxu0 0.0
    %718 = vmatprep.subr.mxu0 0.0
    %719 = vmatpush1.msra.mxu0 0.0
    %720 = vmatprep.subr.mxu0 0.0
    %721 = vmatpush1.msra.mxu0 0.0
    %722 = vmatprep.subr.mxu0 0.0
    %723 = vmatpush1.msra.mxu0 0.0
    %724 = vmatprep.subr.mxu0 0.0
    %725 = vmatpush1.msra.mxu0 0.0
    %726 = vmatprep.subr.mxu0 0.0
    %727 = vmatpush1.msra.mxu0 0.0
    %728 = vmatprep.subr.mxu0 0.0
    %729 = vmatpush1.msra.mxu0 0.0
    %730 = vmatprep.subr.mxu0 0.0
    %731 = vmatpush1.msra.mxu0 0.0
    %732 = vmatprep.subr.mxu0 0.0
    %733 = vmatpush1.msra.mxu0 0.0
    %734 = vmatprep.subr.mxu0 0.0
    %735 = vmatpush1.msra.mxu0 0.0
    %736 = vmatprep.subr.mxu0 0.0
    %737 = vmatpush1.msra.mxu0 0.0
    %738 = vmatprep.subr.mxu0 0.0
    %739 = vmatpush1.msra.mxu0 0.0
    %740 = vmatprep.subr.mxu0 0.0
    %741 = vmatpush1.msra.mxu0 0.0
    %742 = vmatprep.mubr.f32.mxu0 0.0
    %743 = vmatmul.mubr.f32.gmra.mrb[0].mxu0 %v676
    %v744 = vpop.f32.mrb[0].mxu0
    %v745 = vadd.f32 0.0, %v744
    %v746 = vpop.f32.mrb[0].mxu0
    %747 = vdwg.mxu0
    %v749 = vrot.slane %v745, 3
    %v751 = vadd.f32 %v131, %v749
    %v752 = vtanh.pop %v751
    %v753 = vmul.f32 %v752, 0.5
    %v754 = vadd.f32 %v753, 0.5
    %v756 = vrot.slane %v660, 7
    %v758 = vmul.f32 %v754, %v756
    %760 = vrot.lane.b32.xlu0 %v752, 64
    %v761 = vpop.permute.xlu0 %760
    %v763 = vmul.f32 %v754, %v761
    %765 = vrot.lane.b32.xlu0 %v763, 32
    %v766 = vpop.permute.xlu0 %765
    %v768 = vadd.f32 %v758, %v766
    %v769 = vtanh.pop %v768
    %771 = vrot.lane.b32.xlu0 %v769, 64
    %v772 = vpop.permute.xlu0 %771
    %v774 = vmul.f32 %v754, %v772
    %776 = vrot.lane.b32.xlu0 %v774, 32
    %v777 = vpop.permute.xlu0 %776
    %vm779 = vcmask 259077
    %780 = vst.msk [vmem:[#allocation5] sm:$0x20] %vm779, %v777
    %v781 = vrot.slane %v774, 5
    %782 = vrot.lane.b32.xlu0 %v781, 32
    %v783 = vpop.permute.xlu0 %782
    %v784 = vsel %vm143, %v783, 0
    %786 = vmatprep.subr.mxu0 0.0
    %787 = vmatpush1.msra.mxu0 %v139
    %788 = vmatprep.subr.mxu0 0.0
    %789 = vmatpush1.msra.mxu0 %v140
    %790 = vmatprep.subr.mxu0 0.0
    %791 = vmatpush1.msra.mxu0 %v141
    %792 = vmatprep.subr.mxu0 0.0
    %793 = vmatpush1.msra.mxu0 %v142
    %794 = vmatprep.subr.mxu0 0.0
    %795 = vmatpush1.msra.mxu0 0.0
    %796 = vmatprep.subr.mxu0 0.0
    %797 = vmatpush1.msra.mxu0 0.0
    %798 = vmatprep.subr.mxu0 0.0
    %799 = vmatpush1.msra.mxu0 0.0
    %800 = vmatprep.subr.mxu0 0.0
    %801 = vmatpush1.msra.mxu0 0.0
    %802 = vmatprep.subr.mxu0 0.0
    %803 = vmatpush1.msra.mxu0 0.0
    %804 = vmatprep.subr.mxu0 0.0
    %805 = vmatpush1.msra.mxu0 0.0
    %806 = vmatprep.subr.mxu0 0.0
    %807 = vmatpush1.msra.mxu0 0.0
    %808 = vmatprep.subr.mxu0 0.0
    %809 = vmatpush1.msra.mxu0 0.0
    %810 = vmatprep.subr.mxu0 0.0
    %811 = vmatpush1.msra.mxu0 0.0
    %812 = vmatprep.subr.mxu0 0.0
    %813 = vmatpush1.msra.mxu0 0.0
    %814 = vmatprep.subr.mxu0 0.0
    %815 = vmatpush1.msra.mxu0 0.0
    %816 = vmatprep.subr.mxu0 0.0
    %817 = vmatpush1.msra.mxu0 0.0
    %818 = vmatprep.subr.mxu0 0.0
    %819 = vmatpush1.msra.mxu0 0.0
    %820 = vmatprep.subr.mxu0 0.0
    %821 = vmatpush1.msra.mxu0 0.0
    %822 = vmatprep.subr.mxu0 0.0
    %823 = vmatpush1.msra.mxu0 0.0
    %824 = vmatprep.subr.mxu0 0.0
    %825 = vmatpush1.msra.mxu0 0.0
    %826 = vmatprep.subr.mxu0 0.0
    %827 = vmatpush1.msra.mxu0 0.0
    %828 = vmatprep.subr.mxu0 0.0
    %829 = vmatpush1.msra.mxu0 0.0
    %830 = vmatprep.subr.mxu0 0.0
    %831 = vmatpush1.msra.mxu0 0.0
    %832 = vmatprep.subr.mxu0 0.0
    %833 = vmatpush1.msra.mxu0 0.0
    %834 = vmatprep.subr.mxu0 0.0
    %835 = vmatpush1.msra.mxu0 0.0
    %836 = vmatprep.subr.mxu0 0.0
    %837 = vmatpush1.msra.mxu0 0.0
    %838 = vmatprep.subr.mxu0 0.0
    %839 = vmatpush1.msra.mxu0 0.0
    %840 = vmatprep.subr.mxu0 0.0
    %841 = vmatpush1.msra.mxu0 0.0
    %842 = vmatprep.subr.mxu0 0.0
    %843 = vmatpush1.msra.mxu0 0.0
    %844 = vmatprep.subr.mxu0 0.0
    %845 = vmatpush1.msra.mxu0 0.0
    %846 = vmatprep.subr.mxu0 0.0
    %847 = vmatpush1.msra.mxu0 0.0
    %848 = vmatprep.subr.mxu0 0.0
    %849 = vmatpush1.msra.mxu0 0.0
    %850 = vmatprep.mubr.f32.mxu0 0.0
    %851 = vmatmul.mubr.f32.gmra.mrb[0].mxu0 %v784
    %v852 = vpop.f32.mrb[0].mxu0
    %v853 = vadd.f32 0.0, %v852
    %v854 = vpop.f32.mrb[0].mxu0
    %855 = vdwg.mxu0
    %v857 = vrot.slane %v853, 2
    %v859 = vadd.f32 %v131, %v857
    %v860 = vtanh.pop %v859
    %v861 = vmul.f32 %v860, 0.5
    %v862 = vadd.f32 %v861, 0.5
    %v864 = vrot.slane %v768, 7
    %v866 = vmul.f32 %v862, %v864
    %868 = vrot.lane.b32.xlu0 %v860, 64
    %v869 = vpop.permute.xlu0 %868
    %v871 = vmul.f32 %v862, %v869
    %873 = vrot.lane.b32.xlu0 %v871, 32
    %v874 = vpop.permute.xlu0 %873
    %v876 = vadd.f32 %v866, %v874
    %v877 = vtanh.pop %v876
    %879 = vrot.lane.b32.xlu0 %v877, 64
    %v880 = vpop.permute.xlu0 %879
    %v882 = vmul.f32 %v862, %v880
    %884 = vrot.lane.b32.xlu0 %v882, 32
    %v885 = vpop.permute.xlu0 %884
    %vm887 = vcmask 260102
    %888 = vst.msk [vmem:[#allocation5] sm:$0x40] %vm887, %v885
    %v889 = vrot.slane %v882, 6
    %890 = vrot.lane.b32.xlu0 %v889, 32
    %v891 = vpop.permute.xlu0 %890
    %v892 = vsel %vm143, %v891, 0
    %894 = vmatprep.subr.mxu0 0.0
    %895 = vmatpush1.msra.mxu0 %v139
    %896 = vmatprep.subr.mxu0 0.0
    %897 = vmatpush1.msra.mxu0 %v140
    %898 = vmatprep.subr.mxu0 0.0
    %899 = vmatpush1.msra.mxu0 %v141
    %900 = vmatprep.subr.mxu0 0.0
    %901 = vmatpush1.msra.mxu0 %v142
    %902 = vmatprep.subr.mxu0 0.0
    %903 = vmatpush1.msra.mxu0 0.0
    %904 = vmatprep.subr.mxu0 0.0
    %905 = vmatpush1.msra.mxu0 0.0
    %906 = vmatprep.subr.mxu0 0.0
    %907 = vmatpush1.msra.mxu0 0.0
    %908 = vmatprep.subr.mxu0 0.0
    %909 = vmatpush1.msra.mxu0 0.0
    %910 = vmatprep.subr.mxu0 0.0
    %911 = vmatpush1.msra.mxu0 0.0
    %912 = vmatprep.subr.mxu0 0.0
    %913 = vmatpush1.msra.mxu0 0.0
    %914 = vmatprep.subr.mxu0 0.0
    %915 = vmatpush1.msra.mxu0 0.0
    %916 = vmatprep.subr.mxu0 0.0
    %917 = vmatpush1.msra.mxu0 0.0
    %918 = vmatprep.subr.mxu0 0.0
    %919 = vmatpush1.msra.mxu0 0.0
    %920 = vmatprep.subr.mxu0 0.0
    %921 = vmatpush1.msra.mxu0 0.0
    %922 = vmatprep.subr.mxu0 0.0
    %923 = vmatpush1.msra.mxu0 0.0
    %924 = vmatprep.subr.mxu0 0.0
    %925 = vmatpush1.msra.mxu0 0.0
    %926 = vmatprep.subr.mxu0 0.0
    %927 = vmatpush1.msra.mxu0 0.0
    %928 = vmatprep.subr.mxu0 0.0
    %929 = vmatpush1.msra.mxu0 0.0
    %930 = vmatprep.subr.mxu0 0.0
    %931 = vmatpush1.msra.mxu0 0.0
    %932 = vmatprep.subr.mxu0 0.0
    %933 = vmatpush1.msra.mxu0 0.0
    %934 = vmatprep.subr.mxu0 0.0
    %935 = vmatpush1.msra.mxu0 0.0
    %936 = vmatprep.subr.mxu0 0.0
    %937 = vmatpush1.msra.mxu0 0.0
    %938 = vmatprep.subr.mxu0 0.0
    %939 = vmatpush1.msra.mxu0 0.0
    %940 = vmatprep.subr.mxu0 0.0
    %941 = vmatpush1.msra.mxu0 0.0
    %942 = vmatprep.subr.mxu0 0.0
    %943 = vmatpush1.msra.mxu0 0.0
    %944 = vmatprep.subr.mxu0 0.0
    %945 = vmatpush1.msra.mxu0 0.0
    %946 = vmatprep.subr.mxu0 0.0
    %947 = vmatpush1.msra.mxu0 0.0
    %948 = vmatprep.subr.mxu0 0.0
    %949 = vmatpush1.msra.mxu0 0.0
    %950 = vmatprep.subr.mxu0 0.0
    %951 = vmatpush1.msra.mxu0 0.0
    %952 = vmatprep.subr.mxu0 0.0
    %953 = vmatpush1.msra.mxu0 0.0
    %954 = vmatprep.subr.mxu0 0.0
    %955 = vmatpush1.msra.mxu0 0.0
    %956 = vmatprep.subr.mxu0 0.0
    %957 = vmatpush1.msra.mxu0 0.0
    %958 = vmatprep.mubr.f32.mxu0 0.0
    %959 = vmatmul.mubr.f32.gmra.mrb[0].mxu0 %v892
    %v960 = vpop.f32.mrb[0].mxu0
    %v961 = vadd.f32 0.0, %v960
    %v962 = vpop.f32.mrb[0].mxu0
    %963 = vdwg.mxu0
    %v965 = vrot.slane %v961, 1
    %v967 = vadd.f32 %v131, %v965
    %v968 = vtanh.pop %v967
    %v969 = vmul.f32 %v968, 0.5
    %v970 = vadd.f32 %v969, 0.5
    %v972 = vrot.slane %v876, 7
    %v974 = vmul.f32 %v970, %v972
    %976 = vrot.lane.b32.xlu0 %v968, 64
    %v977 = vpop.permute.xlu0 %976
    %v979 = vmul.f32 %v970, %v977
    %981 = vrot.lane.b32.xlu0 %v979, 32
    %v982 = vpop.permute.xlu0 %981
    %v984 = vadd.f32 %v974, %v982
    %v985 = vtanh.pop %v984
    %987 = vrot.lane.b32.xlu0 %v985, 64
    %v988 = vpop.permute.xlu0 %987
    %v990 = vmul.f32 %v970, %v988
    %992 = vrot.lane.b32.xlu0 %v990, 32
    %v993 = vpop.permute.xlu0 %992
    %vm995 = vcmask 261127
    %996 = vst.msk [vmem:[#allocation5] sm:$0x80] %vm995, %v993
    %v997 = vrot.slane %v990, 7
    %998 = vrot.lane.b32.xlu0 %v997, 32
    %v999 = vpop.permute.xlu0 %998
    %v1000 = vsel %vm143, %v999, 0
    %1002 = vmatprep.subr.mxu0 0.0
    %1003 = vmatpush1.msra.mxu0 %v139
    %1004 = vmatprep.subr.mxu0 0.0
    %1005 = vmatpush1.msra.mxu0 %v140
    %1006 = vmatprep.subr.mxu0 0.0
    %1007 = vmatpush1.msra.mxu0 %v141
    %1008 = vmatprep.subr.mxu0 0.0
    %1009 = vmatpush1.msra.mxu0 %v142
    %1010 = vmatprep.subr.mxu0 0.0
    %1011 = vmatpush1.msra.mxu0 0.0
    %1012 = vmatprep.subr.mxu0 0.0
    %1013 = vmatpush1.msra.mxu0 0.0
    %1014 = vmatprep.subr.mxu0 0.0
    %1015 = vmatpush1.msra.mxu0 0.0
    %1016 = vmatprep.subr.mxu0 0.0
    %1017 = vmatpush1.msra.mxu0 0.0
    %1018 = vmatprep.subr.mxu0 0.0
    %1019 = vmatpush1.msra.mxu0 0.0
    %1020 = vmatprep.subr.mxu0 0.0
    %1021 = vmatpush1.msra.mxu0 0.0
    %1022 = vmatprep.subr.mxu0 0.0
    %1023 = vmatpush1.msra.mxu0 0.0
    %1024 = vmatprep.subr.mxu0 0.0
    %1025 = vmatpush1.msra.mxu0 0.0
    %1026 = vmatprep.subr.mxu0 0.0
    %1027 = vmatpush1.msra.mxu0 0.0
    %1028 = vmatprep.subr.mxu0 0.0
    %1029 = vmatpush1.msra.mxu0 0.0
    %1030 = vmatprep.subr.mxu0 0.0
    %1031 = vmatpush1.msra.mxu0 0.0
    %1032 = vmatprep.subr.mxu0 0.0
    %1033 = vmatpush1.msra.mxu0 0.0
    %1034 = vmatprep.subr.mxu0 0.0
    %1035 = vmatpush1.msra.mxu0 0.0
    %1036 = vmatprep.subr.mxu0 0.0
    %1037 = vmatpush1.msra.mxu0 0.0
    %1038 = vmatprep.subr.mxu0 0.0
    %1039 = vmatpush1.msra.mxu0 0.0
    %1040 = vmatprep.subr.mxu0 0.0
    %1041 = vmatpush1.msra.mxu0 0.0
    %1042 = vmatprep.subr.mxu0 0.0
    %1043 = vmatpush1.msra.mxu0 0.0
    %1044 = vmatprep.subr.mxu0 0.0
    %1045 = vmatpush1.msra.mxu0 0.0
    %1046 = vmatprep.subr.mxu0 0.0
    %1047 = vmatpush1.msra.mxu0 0.0
    %1048 = vmatprep.subr.mxu0 0.0
    %1049 = vmatpush1.msra.mxu0 0.0
    %1050 = vmatprep.subr.mxu0 0.0
    %1051 = vmatpush1.msra.mxu0 0.0
    %1052 = vmatprep.subr.mxu0 0.0
    %1053 = vmatpush1.msra.mxu0 0.0
    %1054 = vmatprep.subr.mxu0 0.0
    %1055 = vmatpush1.msra.mxu0 0.0
    %1056 = vmatprep.subr.mxu0 0.0
    %1057 = vmatpush1.msra.mxu0 0.0
    %1058 = vmatprep.subr.mxu0 0.0
    %1059 = vmatpush1.msra.mxu0 0.0
    %1060 = vmatprep.subr.mxu0 0.0
    %1061 = vmatpush1.msra.mxu0 0.0
    %1062 = vmatprep.subr.mxu0 0.0
    %1063 = vmatpush1.msra.mxu0 0.0
    %1064 = vmatprep.subr.mxu0 0.0
    %1065 = vmatpush1.msra.mxu0 0.0
    %1066 = vmatprep.mubr.f32.mxu0 0.0
    %1067 = vmatmul.mubr.f32.gmra.mrb[0].mxu0 %v1000
    %v1068 = vpop.f32.mrb[0].mxu0
    %v1069 = vadd.f32 0.0, %v1068
    %v1070 = vpop.f32.mrb[0].mxu0
    %1071 = vdwg.mxu0
    %v1072 = vadd.f32 %v136, %v1069
    %v1073 = vtanh.pop %v1072
    %v1074 = vmul.f32 %v1073, 0.5
    %v1075 = vadd.f32 %v1074, 0.5
    %v1077 = vrot.slane %v984, 7
    %v1079 = vmul.f32 %v1075, %v1077
    %1081 = vrot.lane.b32.xlu0 %v1073, 64
    %v1082 = vpop.permute.xlu0 %1081
    %v1084 = vmul.f32 %v1075, %v1082
    %1086 = vrot.lane.b32.xlu0 %v1084, 32
    %v1087 = vpop.permute.xlu0 %1086
    %v1089 = vadd.f32 %v1079, %v1087
    %v1090 = vtanh.pop %v1089
    %1092 = vrot.lane.b32.xlu0 %v1090, 64
    %v1093 = vpop.permute.xlu0 %1092
    %v1095 = vmul.f32 %v1075, %v1093
    %1097 = vrot.lane.b32.xlu0 %v1095, 32
    %v1098 = vpop.permute.xlu0 %1097
    %1100 = vst.msk [vmem:[#allocation5 + $0x8] sm:$0x1] %vm242, %v1098
    // Predicated region
    $region22: #{tpu_custom_call.1} parent=1 // pred_check
      _
    $region23: #{tpu_custom_call.1} parent=1 // pred_check_branch
      %1102 = sbr.rel (0) target = $region25
    $region24: #{tpu_custom_call.1} parent=1 // pred_region
      %s1104 = ssub.s32 256, 256
      %1105 = vsyncadd [#allocation4], %s1104
      %s1106 = sshll.u32 [#allocation5], 4
      %s1107 = int_to_ptr.vmem [resolvable:$true] %s1106
      %1112 = dma.vmem_to_hbm [thread:$0]  %s1107, 256, %s4, [#allocation4], 128, 128, 8
    $region25: #{tpu_custom_call.1} parent=1 // pred_fallthru
      _
    // Predicated region
    $region26: #{tpu_custom_call.1} parent=1 // pred_check
      _
    $region27: #{tpu_custom_call.1} parent=1 // pred_check_branch
      %1114 = sbr.rel (0) target = $region29
    $region28: #{tpu_custom_call.1} parent=1 // pred_region
      %1115 = dma.done [#allocation4], 256
    $region29: #{tpu_custom_call.1} parent=1 // pred_fallthru
      _
    %1116 = vsyncpa [#allocation3], 1
    %1117 = vsyncpa [#allocation4], 1

</llo_original>
